<compile_context>
chip_gen: v7x
topology: tpu7x:2x2x1
jax: 0.10.0
libtpu: 0.0.40
codegen_flags: <defaults>
</compile_context>

<pallas_src>
import functools

import jax
import jax.numpy as jnp
import numpy as np
from jax.experimental import pallas as pl
from jax.experimental.pallas import tpu as pltpu

V_TH = 1.0  # LIF firing threshold (LIFAct step=1, zero initial membrane)


def _spike_conv_kernel(x_ref, g_ref, scale_ref, bias_ref, o_ref,
                       *, dh, stride_h, bn_acti):
    """One grid step = one block of NB images.

    x_ref    : (NB, H_pad, W*Cin)        H-padded, channel-packed input
    g_ref    : (KH, W*Cin, W_out*Cout)   block-Toeplitz conv weights
    scale_ref: (1, W_out*Cout)           BN scale tiled over W_out
    bias_ref : (1, W_out*Cout)           BN bias  tiled over W_out
    o_ref    : (NB, H_out, W_out*Cout)   spikes (or raw conv if bn_acti=False)
    """
    nb, h_out, _ = o_ref.shape
    kh_taps = g_ref.shape[0]

    for b in range(nb):                      # static, small
        acc = jnp.zeros((h_out, o_ref.shape[2]), jnp.float32)
        for kh in range(kh_taps):            # static, KH matmuls on the MXU
            if stride_h == 1:
                rows = x_ref[b, kh * dh:kh * dh + h_out, :]
            else:
                rows = x_ref[b, pl.ds(kh * dh, h_out, stride=stride_h), :]
            acc = acc + jax.lax.dot_general(
                rows, g_ref[kh],
                dimension_numbers=(((1,), (0,)), ((), ())),
                preferred_element_type=jnp.float32,
            )
        if bn_acti:
            y = acc * scale_ref[...] + bias_ref[...]   # lane-dense BN affine
            o_ref[b] = (y >= V_TH).astype(o_ref.dtype)  # LIF -> 0/1 spikes
        else:
            o_ref[b] = acc.astype(o_ref.dtype)


def spike_conv(x_nchw, weight_oihw, bn_scale=None, bn_bias=None, *,
               stride=1, padding=1, dilation=(1, 1), bn_acti=True,
               images_per_block=1, compute_dtype=None, out_dtype=None):
    """Spike_Conv forward.  x_nchw: (N, Cin, H, W); weight_oihw: (Cout, Cin, KH, KW)."""
    N, Cin, H, W = x_nchw.shape
    Cout, Cin_w, KH, KW = weight_oihw.shape
    assert Cin_w == Cin, "groups != 1 not supported"  # TODO(synk): grouped conv

    sh, sw = (stride, stride) if isinstance(stride, int) else tuple(stride)
    ph, pw = (padding, padding) if isinstance(padding, int) else tuple(padding)
    dh, dw = (dilation, dilation) if isinstance(dilation, int) else tuple(dilation)

    H_out = (H + 2 * ph - dh * (KH - 1) - 1) // sh + 1
    W_out = (W + 2 * pw - dw * (KW - 1) - 1) // sw + 1
    WC, WoC = W * Cin, W_out * Cout

    # ---- block-Toeplitz weights: fold KW taps, Cin, stride_w and W-padding ----
    # sel[kw, wi, w] = 1  iff  input column wi feeds output column w via tap kw.
    sel_np = np.zeros((KW, W, W_out), np.float32)
    for kw in range(KW):
        for w in range(W_out):
            wi = w * sw + kw * dw - pw
            if 0 <= wi < W:
                sel_np[kw, wi, w] = 1.0
    sel = jnp.asarray(sel_np)
    w_hwio = jnp.transpose(weight_oihw, (2, 3, 1, 0))          # (KH, KW, Cin, Cout)
    # Exact placement (broadcast-multiply by 0/1 + sum; no matmul precision policy):
    g = (sel[None, :, :, None, :, None] *
         w_hwio[:, :, None, :, None, :].astype(jnp.float32)).sum(axis=1)
    g = g.reshape(KH, WC, WoC).astype(weight_oihw.dtype)       # (KH, W*Cin, W_out*Cout)

    # ---- BN affine, tiled to the lane-dense output layout ----
    if bn_acti:
        scale_tiled = jnp.tile(bn_scale.astype(jnp.float32), W_out).reshape(1, WoC)
        bias_tiled = jnp.tile(bn_bias.astype(jnp.float32), W_out).reshape(1, WoC)
    else:
        scale_tiled = jnp.ones((1, WoC), jnp.float32)
        bias_tiled = jnp.zeros((1, WoC), jnp.float32)

    # ---- input: NCHW -> (N, H_pad, W*Cin); W-padding already folded into g ----
    # (transpose + reshape + H-pad fuse into a single XLA copy pass)
    x2d = jnp.transpose(x_nchw, (0, 2, 3, 1)).reshape(N, H, WC)
    x2d = jnp.pad(x2d, ((0, 0), (ph, ph), (0, 0)))
    H_pad = H + 2 * ph

    if compute_dtype is not None:            # e.g. jnp.bfloat16 for native MXU mode
        x2d = x2d.astype(compute_dtype)
        g = g.astype(compute_dtype)
    if out_dtype is None:
        out_dtype = jnp.bfloat16 if bn_acti else x_nchw.dtype

    nb = images_per_block if (images_per_block > 0 and N % images_per_block == 0) else 1
    kernel = functools.partial(_spike_conv_kernel, dh=dh, stride_h=sh, bn_acti=bn_acti)

    out = pl.pallas_call(
        kernel,
        out_shape=jax.ShapeDtypeStruct((N, H_out, WoC), out_dtype),
        grid_spec=pltpu.PrefetchScalarGridSpec(
            num_scalar_prefetch=0,
            grid=(N // nb,),
            in_specs=[
                pl.BlockSpec((nb, H_pad, WC), lambda n: (n, 0, 0)),
                pl.BlockSpec((KH, WC, WoC), lambda n: (0, 0, 0)),
                pl.BlockSpec((1, WoC), lambda n: (0, 0)),
                pl.BlockSpec((1, WoC), lambda n: (0, 0)),
            ],
            out_specs=pl.BlockSpec((nb, H_out, WoC), lambda n: (n, 0, 0)),
        ),
        compiler_params=pltpu.CompilerParams(dimension_semantics=("parallel",)),
    )(x2d, g, scale_tiled, bias_tiled)

    # (N, H_out, W_out*Cout) -> NCHW to match the PyTorch module's convention.
    out_nhwc = out.reshape(N, H_out, W_out, Cout)
    return jnp.transpose(out_nhwc, (0, 3, 1, 2))


if __name__ == "__main__":
    key = jax.random.PRNGKey(0)
    k1, k2, k3, k4, k5, k6 = jax.random.split(key, 6)

    N, Cin, H, W = 2, 4, 16, 16
    Cout, K = 8, 3
    eps = 0.001

    x = jax.random.normal(k1, (N, Cin, H, W), jnp.float32)
    weight = jax.random.normal(k2, (Cout, Cin, K, K), jnp.float32) * 0.3
    gamma = 1.0 + 0.1 * jax.random.normal(k3, (Cout,), jnp.float32)
    beta = 0.1 * jax.random.normal(k4, (Cout,), jnp.float32)
    running_mean = 0.1 * jax.random.normal(k5, (Cout,), jnp.float32)
    running_var = jax.random.uniform(k6, (Cout,), jnp.float32, minval=0.5, maxval=1.5)

    # Fold BatchNorm2d(eps=1e-3) eval-mode stats into per-channel scale/bias.
    bn_scale = gamma / jnp.sqrt(running_var + eps)
    bn_bias = beta - running_mean * bn_scale

    def reference(x, w, scale, bias, *, stride, padding, dilation, bn_acti):
        y = jax.lax.conv_general_dilated(
            x, w, window_strides=(stride, stride),
            padding=((padding, padding), (padding, padding)),
            rhs_dilation=dilation, dimension_numbers=("NCHW", "OIHW", "NCHW"))
        if bn_acti:
            y = y * scale[None, :, None, None] + bias[None, :, None, None]
            y = (y >= V_TH).astype(jnp.float32)
        return y

    # Case 1: standard 3x3, stride=1, padding=1, BN + LIF (both images in one step).
    out1 = spike_conv(x, weight, bn_scale, bn_bias, stride=1, padding=1,
                      dilation=(1, 1), bn_acti=True, images_per_block=2)
    out1 = jax.block_until_ready(out1)
    ref1 = reference(x, weight, bn_scale, bn_bias, stride=1, padding=1,
                     dilation=(1, 1), bn_acti=True)
    assert out1.shape == ref1.shape == (N, Cout, H, W)
    np.testing.assert_allclose(np.asarray(out1.astype(jnp.float32)),
                               np.asarray(ref1), atol=1e-4)

    # Case 2: dilated 3x3 (dilation=2, padding=2), BN + LIF — exercises the
    # dilation handling in the Toeplitz fold and the kh row offsets.
    out2 = spike_conv(x, weight, bn_scale, bn_bias, stride=1, padding=2,
                      dilation=(2, 2), bn_acti=True, images_per_block=1)
    out2 = jax.block_until_ready(out2)
    ref2 = reference(x, weight, bn_scale, bn_bias, stride=1, padding=2,
                     dilation=(2, 2), bn_acti=True)
    np.testing.assert_allclose(np.asarray(out2.astype(jnp.float32)),
                               np.asarray(ref2), atol=1e-4)

    print("KERNEL_OK")
</pallas_src>

<mosaic_0001>
module attributes {stable_mosaic.version = 11 : i64} {
  func.func @_spike_conv_kernel(%arg0: i32, %arg1: memref<2x18x64xf32, #tpu.memory_space<vmem>>, %arg2: memref<3x64x128xf32, #tpu.memory_space<vmem>>, %arg3: memref<1x128xf32, #tpu.memory_space<vmem>>, %arg4: memref<1x128xf32, #tpu.memory_space<vmem>>, %arg5: memref<2x16x128xbf16, #tpu.memory_space<vmem>>) attributes {dimension_semantics = [#tpu.dimension_semantics<parallel>], iteration_bounds = array<i64: 1>, scalar_prefetch = 0 : i64, scratch_operands = 0 : i64, tpu.core_type = #tpu.core_type<tc>, window_params = [{transform_indices = @transform_0, window_bounds = array<i64: 2, 18, 64>}, {pipeline_mode = #tpu.pipeline_mode<synchronous>, transform_indices = @transform_1, window_bounds = array<i64: 3, 64, 128>}, {pipeline_mode = #tpu.pipeline_mode<synchronous>, transform_indices = @transform_2, window_bounds = array<i64: 1, 128>}, {pipeline_mode = #tpu.pipeline_mode<synchronous>, transform_indices = @transform_3, window_bounds = array<i64: 1, 128>}, {transform_indices = @transform_4, window_bounds = array<i64: 2, 16, 128>}]} {
    %cst = arith.constant 0.000000e+00 : f32
    %0 = vector.broadcast %cst : f32 to vector<16x128xf32>
    %c0 = arith.constant 0 : index
    %c0_0 = arith.constant 0 : index
    %c0_1 = arith.constant 0 : index
    %1 = vector.load %arg1[%c0, %c0_0, %c0_1] : memref<2x18x64xf32, #tpu.memory_space<vmem>>, vector<1x16x64xf32>
    %2 = vector.shape_cast %1 : vector<1x16x64xf32> to vector<16x64xf32>
    %c0_2 = arith.constant 0 : index
    %c0_3 = arith.constant 0 : index
    %c0_4 = arith.constant 0 : index
    %3 = vector.load %arg2[%c0_2, %c0_3, %c0_4] : memref<3x64x128xf32, #tpu.memory_space<vmem>>, vector<1x64x128xf32>
    %4 = vector.shape_cast %3 : vector<1x64x128xf32> to vector<64x128xf32>
    %cst_5 = arith.constant dense<0.000000e+00> : vector<16x128xf32>
    %5 = tpu.matmul %2, %4, %cst_5 {dimension_numbers = #tpu.dot_dimension_numbers<[1], [0], [0], [1], [0, 0, 1, 1], [], []>} : vector<16x64xf32>, vector<64x128xf32>, vector<16x128xf32> -> vector<16x128xf32>
    %6 = arith.addf %0, %5 : vector<16x128xf32>
    %c0_6 = arith.constant 0 : index
    %c1 = arith.constant 1 : index
    %c0_7 = arith.constant 0 : index
    %7 = vector.load %arg1[%c0_6, %c1, %c0_7] : memref<2x18x64xf32, #tpu.memory_space<vmem>>, vector<1x16x64xf32>
    %8 = vector.shape_cast %7 : vector<1x16x64xf32> to vector<16x64xf32>
    %c1_8 = arith.constant 1 : index
    %c0_9 = arith.constant 0 : index
    %c0_10 = arith.constant 0 : index
    %9 = vector.load %arg2[%c1_8, %c0_9, %c0_10] : memref<3x64x128xf32, #tpu.memory_space<vmem>>, vector<1x64x128xf32>
    %10 = vector.shape_cast %9 : vector<1x64x128xf32> to vector<64x128xf32>
    %cst_11 = arith.constant dense<0.000000e+00> : vector<16x128xf32>
    %11 = tpu.matmul %8, %10, %cst_11 {dimension_numbers = #tpu.dot_dimension_numbers<[1], [0], [0], [1], [0, 0, 1, 1], [], []>} : vector<16x64xf32>, vector<64x128xf32>, vector<16x128xf32> -> vector<16x128xf32>
    %12 = arith.addf %6, %11 : vector<16x128xf32>
    %c0_12 = arith.constant 0 : index
    %c2 = arith.constant 2 : index
    %c0_13 = arith.constant 0 : index
    %13 = vector.load %arg1[%c0_12, %c2, %c0_13] : memref<2x18x64xf32, #tpu.memory_space<vmem>>, vector<1x16x64xf32>
    %14 = vector.shape_cast %13 : vector<1x16x64xf32> to vector<16x64xf32>
    %c2_14 = arith.constant 2 : index
    %c0_15 = arith.constant 0 : index
    %c0_16 = arith.constant 0 : index
    %15 = vector.load %arg2[%c2_14, %c0_15, %c0_16] : memref<3x64x128xf32, #tpu.memory_space<vmem>>, vector<1x64x128xf32>
    %16 = vector.shape_cast %15 : vector<1x64x128xf32> to vector<64x128xf32>
    %cst_17 = arith.constant dense<0.000000e+00> : vector<16x128xf32>
    %17 = tpu.matmul %14, %16, %cst_17 {dimension_numbers = #tpu.dot_dimension_numbers<[1], [0], [0], [1], [0, 0, 1, 1], [], []>} : vector<16x64xf32>, vector<64x128xf32>, vector<16x128xf32> -> vector<16x128xf32>
    %18 = arith.addf %12, %17 : vector<16x128xf32>
    %c0_18 = arith.constant 0 : index
    %c0_19 = arith.constant 0 : index
    %19 = vector.load %arg3[%c0_18, %c0_19] : memref<1x128xf32, #tpu.memory_space<vmem>>, vector<1x128xf32>
    %20 = vector.broadcast %19 : vector<1x128xf32> to vector<16x128xf32>
    %21 = arith.mulf %18, %20 : vector<16x128xf32>
    %c0_20 = arith.constant 0 : index
    %c0_21 = arith.constant 0 : index
    %22 = vector.load %arg4[%c0_20, %c0_21] : memref<1x128xf32, #tpu.memory_space<vmem>>, vector<1x128xf32>
    %23 = vector.broadcast %22 : vector<1x128xf32> to vector<16x128xf32>
    %24 = arith.addf %21, %23 : vector<16x128xf32>
    %cst_22 = arith.constant 1.000000e+00 : f32
    %25 = vector.broadcast %cst_22 : f32 to vector<16x128xf32>
    %26 = arith.cmpf oge, %24, %25 : vector<16x128xf32>
    %27 = arith.extui %26 : vector<16x128xi1> to vector<16x128xi32>
    %28 = arith.sitofp %27 : vector<16x128xi32> to vector<16x128xf32>
    %29 = arith.truncf %28 : vector<16x128xf32> to vector<16x128xbf16>
    %c0_23 = arith.constant 0 : index
    %c0_24 = arith.constant 0 : index
    %c0_25 = arith.constant 0 : index
    %30 = vector.load %arg5[%c0_23, %c0_24, %c0_25] : memref<2x16x128xbf16, #tpu.memory_space<vmem>>, vector<1x16x128xbf16>
    %31 = vector.shape_cast %30 : vector<1x16x128xbf16> to vector<16x128xbf16>
    %32 = vector.shape_cast %29 : vector<16x128xbf16> to vector<1x16x128xbf16>
    tpu.vector_store %arg5[%c0_23, %c0_24, %c0_25], %32 {strides = array<i32>} : memref<2x16x128xbf16, #tpu.memory_space<vmem>>, vector<1x16x128xbf16>,
    %cst_26 = arith.constant 0.000000e+00 : f32
    %33 = vector.broadcast %cst_26 : f32 to vector<16x128xf32>
    %c1_27 = arith.constant 1 : index
    %c0_28 = arith.constant 0 : index
    %c0_29 = arith.constant 0 : index
    %34 = vector.load %arg1[%c1_27, %c0_28, %c0_29] : memref<2x18x64xf32, #tpu.memory_space<vmem>>, vector<1x16x64xf32>
    %35 = vector.shape_cast %34 : vector<1x16x64xf32> to vector<16x64xf32>
    %c0_30 = arith.constant 0 : index
    %c0_31 = arith.constant 0 : index
    %c0_32 = arith.constant 0 : index
    %36 = vector.load %arg2[%c0_30, %c0_31, %c0_32] : memref<3x64x128xf32, #tpu.memory_space<vmem>>, vector<1x64x128xf32>
    %37 = vector.shape_cast %36 : vector<1x64x128xf32> to vector<64x128xf32>
    %cst_33 = arith.constant dense<0.000000e+00> : vector<16x128xf32>
    %38 = tpu.matmul %35, %37, %cst_33 {dimension_numbers = #tpu.dot_dimension_numbers<[1], [0], [0], [1], [0, 0, 1, 1], [], []>} : vector<16x64xf32>, vector<64x128xf32>, vector<16x128xf32> -> vector<16x128xf32>
    %39 = arith.addf %33, %38 : vector<16x128xf32>
    %c1_34 = arith.constant 1 : index
    %c1_35 = arith.constant 1 : index
    %c0_36 = arith.constant 0 : index
    %40 = vector.load %arg1[%c1_34, %c1_35, %c0_36] : memref<2x18x64xf32, #tpu.memory_space<vmem>>, vector<1x16x64xf32>
    %41 = vector.shape_cast %40 : vector<1x16x64xf32> to vector<16x64xf32>
    %c1_37 = arith.constant 1 : index
    %c0_38 = arith.constant 0 : index
    %c0_39 = arith.constant 0 : index
    %42 = vector.load %arg2[%c1_37, %c0_38, %c0_39] : memref<3x64x128xf32, #tpu.memory_space<vmem>>, vector<1x64x128xf32>
    %43 = vector.shape_cast %42 : vector<1x64x128xf32> to vector<64x128xf32>
    %cst_40 = arith.constant dense<0.000000e+00> : vector<16x128xf32>
    %44 = tpu.matmul %41, %43, %cst_40 {dimension_numbers = #tpu.dot_dimension_numbers<[1], [0], [0], [1], [0, 0, 1, 1], [], []>} : vector<16x64xf32>, vector<64x128xf32>, vector<16x128xf32> -> vector<16x128xf32>
    %45 = arith.addf %39, %44 : vector<16x128xf32>
    %c1_41 = arith.constant 1 : index
    %c2_42 = arith.constant 2 : index
    %c0_43 = arith.constant 0 : index
    %46 = vector.load %arg1[%c1_41, %c2_42, %c0_43] : memref<2x18x64xf32, #tpu.memory_space<vmem>>, vector<1x16x64xf32>
    %47 = vector.shape_cast %46 : vector<1x16x64xf32> to vector<16x64xf32>
    %c2_44 = arith.constant 2 : index
    %c0_45 = arith.constant 0 : index
    %c0_46 = arith.constant 0 : index
    %48 = vector.load %arg2[%c2_44, %c0_45, %c0_46] : memref<3x64x128xf32, #tpu.memory_space<vmem>>, vector<1x64x128xf32>
    %49 = vector.shape_cast %48 : vector<1x64x128xf32> to vector<64x128xf32>
    %cst_47 = arith.constant dense<0.000000e+00> : vector<16x128xf32>
    %50 = tpu.matmul %47, %49, %cst_47 {dimension_numbers = #tpu.dot_dimension_numbers<[1], [0], [0], [1], [0, 0, 1, 1], [], []>} : vector<16x64xf32>, vector<64x128xf32>, vector<16x128xf32> -> vector<16x128xf32>
    %51 = arith.addf %45, %50 : vector<16x128xf32>
    %c0_48 = arith.constant 0 : index
    %c0_49 = arith.constant 0 : index
    %52 = vector.load %arg3[%c0_48, %c0_49] : memref<1x128xf32, #tpu.memory_space<vmem>>, vector<1x128xf32>
    %53 = vector.broadcast %52 : vector<1x128xf32> to vector<16x128xf32>
    %54 = arith.mulf %51, %53 : vector<16x128xf32>
    %c0_50 = arith.constant 0 : index
    %c0_51 = arith.constant 0 : index
    %55 = vector.load %arg4[%c0_50, %c0_51] : memref<1x128xf32, #tpu.memory_space<vmem>>, vector<1x128xf32>
    %56 = vector.broadcast %55 : vector<1x128xf32> to vector<16x128xf32>
    %57 = arith.addf %54, %56 : vector<16x128xf32>
    %cst_52 = arith.constant 1.000000e+00 : f32
    %58 = vector.broadcast %cst_52 : f32 to vector<16x128xf32>
    %59 = arith.cmpf oge, %57, %58 : vector<16x128xf32>
    %60 = arith.extui %59 : vector<16x128xi1> to vector<16x128xi32>
    %61 = arith.sitofp %60 : vector<16x128xi32> to vector<16x128xf32>
    %62 = arith.truncf %61 : vector<16x128xf32> to vector<16x128xbf16>
    %c1_53 = arith.constant 1 : index
    %c0_54 = arith.constant 0 : index
    %c0_55 = arith.constant 0 : index
    %63 = vector.load %arg5[%c1_53, %c0_54, %c0_55] : memref<2x16x128xbf16, #tpu.memory_space<vmem>>, vector<1x16x128xbf16>
    %64 = vector.shape_cast %63 : vector<1x16x128xbf16> to vector<16x128xbf16>
    %65 = vector.shape_cast %62 : vector<16x128xbf16> to vector<1x16x128xbf16>
    tpu.vector_store %arg5[%c1_53, %c0_54, %c0_55], %65 {strides = array<i32>} : memref<2x16x128xbf16, #tpu.memory_space<vmem>>, vector<1x16x128xbf16>,
    return
  }
  func.func @transform_0(%arg0: i32) -> (i32, i32, i32) {
    %c0_i32 = arith.constant 0 : i32
    %c0_i32_0 = arith.constant 0 : i32
    %c0_i32_1 = arith.constant 0 : i32
    return %arg0, %c0_i32, %c0_i32_0 : i32, i32, i32
  }
  func.func @transform_1(%arg0: i32) -> (i32, i32, i32) {
    %c0_i32 = arith.constant 0 : i32
    %c0_i32_0 = arith.constant 0 : i32
    %c0_i32_1 = arith.constant 0 : i32
    %c0_i32_2 = arith.constant 0 : i32
    return %c0_i32, %c0_i32_0, %c0_i32_1 : i32, i32, i32
  }
  func.func @transform_2(%arg0: i32) -> (i32, i32) {
    %c0_i32 = arith.constant 0 : i32
    %c0_i32_0 = arith.constant 0 : i32
    %c0_i32_1 = arith.constant 0 : i32
    return %c0_i32, %c0_i32_0 : i32, i32
  }
  func.func @transform_3(%arg0: i32) -> (i32, i32) {
    %c0_i32 = arith.constant 0 : i32
    %c0_i32_0 = arith.constant 0 : i32
    %c0_i32_1 = arith.constant 0 : i32
    return %c0_i32, %c0_i32_0 : i32, i32
  }
  func.func @transform_4(%arg0: i32) -> (i32, i32, i32) {
    %c0_i32 = arith.constant 0 : i32
    %c0_i32_0 = arith.constant 0 : i32
    %c0_i32_1 = arith.constant 0 : i32
    return %arg0, %c0_i32, %c0_i32_0 : i32, i32, i32
  }
}

</mosaic_0001>

<llo_original>
// kernel: tpu_custom_call.1
$region0: #{tpu_custom_call.1}
  #allocation0 [shape = 'u32[]', space=smem, size = 0x4, offset = 0x4, fixed_abs, tag = 'smem constant byte address 0x4 - core index']
  #allocation1 [shape = 'u32[144,128]{1,0:T(1,128)}', space=vmem, size = 0x12000, scoped, tag = 'internal scratch']
  %s0 = inlined_call_operand.vmem [shape: f32[2,18,64], index: 0, kind: input, shape index: {}]
  %s1 = inlined_call_operand.hbm [shape: f32[3,64,128], index: 1, kind: input, shape index: {}]
  %s2 = inlined_call_operand.vmem [shape: f32[1,128], index: 2, kind: input, shape index: {}]
  %s3 = inlined_call_operand.vmem [shape: f32[1,128], index: 3, kind: input, shape index: {}]
  %s4 = inlined_call_operand.hbm [shape: bf16[2,16,128], index: 4, kind: output, shape index: {}]
  %s5 = sld [smem:[#allocation0]]
  $region30: #{tpu_custom_call.1} parent=0
    _
  %s7 = ssub.s32 1, %s5
  %s8 = scalar_select 0, %s7, %s5
  $region1: #{tpu_custom_call.1} parent=0
    #allocation2 [shape = 'u8[98304]{0}', space=vmem, size = 0x18000, scoped, tag = 'input window, operand 1, single buffered']
    #allocation3 [shape = 's32[1]{0}', space=sflag, size = 0x4, scoped, tag = 'scoped memory for tpu_custom_call.1']
    #allocation4 [shape = 's32[1]{0}', space=sflag, size = 0x4, scoped, tag = 'scoped memory for tpu_custom_call.1']
    #allocation5 [shape = 'u8[8192]{0}', space=vmem, size = 0x2000, scoped, tag = 'output window, operand 0, single buffered']
    %9 = vsyncpa [#allocation3], 0
    %10 = vsyncpa [#allocation4], 0
    // Predicated region
    $region2: #{tpu_custom_call.1} parent=1 // pred_check
      _
    $region3: #{tpu_custom_call.1} parent=1 // pred_check_branch
      %12 = sbr.rel (0) target = $region5
    $region4: #{tpu_custom_call.1} parent=1 // pred_region
      _
    $region5: #{tpu_custom_call.1} parent=1 // pred_fallthru
      _
    // Predicated region
    $region6: #{tpu_custom_call.1} parent=1 // pred_check
      _
    $region7: #{tpu_custom_call.1} parent=1 // pred_check_branch
      %14 = sbr.rel (0) target = $region9
    $region8: #{tpu_custom_call.1} parent=1 // pred_region
      %s16 = ssub.s32 3072, 3072
      %17 = vsyncadd [#allocation3], %s16
      %s18 = sshll.u32 [#allocation2], 4
      %s19 = int_to_ptr.vmem [resolvable:$true] %s18
      %24 = dma.hbm_to_vmem [thread:$0]  %s1, 3072, %s19, [#allocation3], 128, 128, 8
    $region9: #{tpu_custom_call.1} parent=1 // pred_fallthru
      _
    // Predicated region
    $region10: #{tpu_custom_call.1} parent=1 // pred_check
      _
    $region11: #{tpu_custom_call.1} parent=1 // pred_check_branch
      %26 = sbr.rel (0) target = $region13
    $region12: #{tpu_custom_call.1} parent=1 // pred_region
      _
    $region13: #{tpu_custom_call.1} parent=1 // pred_fallthru
      _
    // Predicated region
    $region14: #{tpu_custom_call.1} parent=1 // pred_check
      _
    $region15: #{tpu_custom_call.1} parent=1 // pred_check_branch
      %28 = sbr.rel (0) target = $region17
    $region16: #{tpu_custom_call.1} parent=1 // pred_region
      _
    $region17: #{tpu_custom_call.1} parent=1 // pred_fallthru
      _
    // Predicated region
    $region18: #{tpu_custom_call.1} parent=1 // pred_check
      _
    $region19: #{tpu_custom_call.1} parent=1 // pred_check_branch
      %30 = sbr.rel (0) target = $region21
    $region20: #{tpu_custom_call.1} parent=1 // pred_region
      %31 = dma.done [#allocation3], 3072
    $region21: #{tpu_custom_call.1} parent=1 // pred_fallthru
      _
    %v32 = vld [vmem:[%s0] sm:$0xff]
    %v33 = vld [vmem:[%s0 + $0x8] sm:$0xff]
    %v34 = vld [vmem:[#allocation2] sm:$0xff]
    %v35 = vld [vmem:[#allocation2 + $0x8] sm:$0xff]
    %v36 = vld [vmem:[#allocation2 + $0x10] sm:$0xff]
    %v37 = vld [vmem:[#allocation2 + $0x18] sm:$0xff]
    %v38 = vld [vmem:[#allocation2 + $0x20] sm:$0xff]
    %v39 = vld [vmem:[#allocation2 + $0x28] sm:$0xff]
    %v40 = vld [vmem:[#allocation2 + $0x30] sm:$0xff]
    %v41 = vld [vmem:[#allocation2 + $0x38] sm:$0xff]
    %v42 = vld [vmem:[%s0 + $0x1] sm:$0xff]
    %v43 = vld [vmem:[%s0 + $0x9] sm:$0xff]
    %s44 = scalar_lea.vmem [#allocation2], 64
    %v45 = vld [vmem:[%s44] sm:$0xff]
    %v46 = vld [vmem:[%s44 + $0x8] sm:$0xff]
    %v47 = vld [vmem:[%s44 + $0x10] sm:$0xff]
    %v48 = vld [vmem:[%s44 + $0x18] sm:$0xff]
    %v49 = vld [vmem:[%s44 + $0x20] sm:$0xff]
    %v50 = vld [vmem:[%s44 + $0x28] sm:$0xff]
    %v51 = vld [vmem:[%s44 + $0x30] sm:$0xff]
    %v52 = vld [vmem:[%s44 + $0x38] sm:$0xff]
    %vm53 = vcmask 523264
    %v55 = vsel %vm53, %v42, 0
    %v58 = vsel %vm53, %v43, 0
    %60 = vmatprep.subr.mxu0 0.0
    %61 = vmatpush1.msra.mxu0 %v45
    %62 = vmatprep.subr.mxu0 0.0
    %63 = vmatpush1.msra.mxu0 %v46
    %64 = vmatprep.subr.mxu0 0.0
    %65 = vmatpush1.msra.mxu0 %v47
    %66 = vmatprep.subr.mxu0 0.0
    %67 = vmatpush1.msra.mxu0 %v48
    %68 = vmatprep.subr.mxu0 0.0
    %69 = vmatpush1.msra.mxu0 %v49
    %70 = vmatprep.subr.mxu0 0.0
    %71 = vmatpush1.msra.mxu0 %v50
    %72 = vmatprep.subr.mxu0 0.0
    %73 = vmatpush1.msra.mxu0 %v51
    %74 = vmatprep.subr.mxu0 0.0
    %75 = vmatpush1.msra.mxu0 %v52
    %76 = vmatprep.subr.mxu0 0.0
    %77 = vmatpush1.msra.mxu0 0.0
    %78 = vmatprep.subr.mxu0 0.0
    %79 = vmatpush1.msra.mxu0 0.0
    %80 = vmatprep.subr.mxu0 0.0
    %81 = vmatpush1.msra.mxu0 0.0
    %82 = vmatprep.subr.mxu0 0.0
    %83 = vmatpush1.msra.mxu0 0.0
    %84 = vmatprep.subr.mxu0 0.0
    %85 = vmatpush1.msra.mxu0 0.0
    %86 = vmatprep.subr.mxu0 0.0
    %87 = vmatpush1.msra.mxu0 0.0
    %88 = vmatprep.subr.mxu0 0.0
    %89 = vmatpush1.msra.mxu0 0.0
    %90 = vmatprep.subr.mxu0 0.0
    %91 = vmatpush1.msra.mxu0 0.0
    %92 = vmatprep.subr.mxu0 0.0
    %93 = vmatpush1.msra.mxu0 0.0
    %94 = vmatprep.subr.mxu0 0.0
    %95 = vmatpush1.msra.mxu0 0.0
    %96 = vmatprep.subr.mxu0 0.0
    %97 = vmatpush1.msra.mxu0 0.0
    %98 = vmatprep.subr.mxu0 0.0
    %99 = vmatpush1.msra.mxu0 0.0
    %100 = vmatprep.subr.mxu0 0.0
    %101 = vmatpush1.msra.mxu0 0.0
    %102 = vmatprep.subr.mxu0 0.0
    %103 = vmatpush1.msra.mxu0 0.0
    %104 = vmatprep.subr.mxu0 0.0
    %105 = vmatpush1.msra.mxu0 0.0
    %106 = vmatprep.subr.mxu0 0.0
    %107 = vmatpush1.msra.mxu0 0.0
    %108 = vmatprep.subr.mxu0 0.0
    %109 = vmatpush1.msra.mxu0 0.0
    %110 = vmatprep.subr.mxu0 0.0
    %111 = vmatpush1.msra.mxu0 0.0
    %112 = vmatprep.subr.mxu0 0.0
    %113 = vmatpush1.msra.mxu0 0.0
    %114 = vmatprep.subr.mxu0 0.0
    %115 = vmatpush1.msra.mxu0 0.0
    %116 = vmatprep.subr.mxu0 0.0
    %117 = vmatpush1.msra.mxu0 0.0
    %118 = vmatprep.subr.mxu0 0.0
    %119 = vmatpush1.msra.mxu0 0.0
    %120 = vmatprep.subr.mxu0 0.0
    %121 = vmatpush1.msra.mxu0 0.0
    %122 = vmatprep.subr.mxu0 0.0
    %123 = vmatpush1.msra.mxu0 0.0
    %124 = vmatprep.mubr.f32.mxu0 0.0
    %125 = vmatmul.mubr.f32.gmra.mrb[0].mxu0 %v55
    %v126 = vpop.f32.mrb[0].mxu0
    %v127 = vadd.f32 0.0, %v126
    %v128 = vpop.f32.mrb[0].mxu0
    %129 = vmatprep.mubr.f32.mxu0 0.0
    %130 = vmatmul.mubr.f32.gmra.mrb[0].mxu0 %v58
    %v131 = vpop.f32.mrb[0].mxu0
    %v132 = vadd.f32 0.0, %v131
    %v133 = vpop.f32.mrb[0].mxu0
    %134 = vdwg.mxu0
    %v136 = vsel %vm53, %v32, 0
    %v139 = vsel %vm53, %v33, 0
    %141 = vmatprep.subr.mxu0 0.0
    %142 = vmatpush1.msra.mxu0 %v34
    %143 = vmatprep.subr.mxu0 0.0
    %144 = vmatpush1.msra.mxu0 %v35
    %145 = vmatprep.subr.mxu0 0.0
    %146 = vmatpush1.msra.mxu0 %v36
    %147 = vmatprep.subr.mxu0 0.0
    %148 = vmatpush1.msra.mxu0 %v37
    %149 = vmatprep.subr.mxu0 0.0
    %150 = vmatpush1.msra.mxu0 %v38
    %151 = vmatprep.subr.mxu0 0.0
    %152 = vmatpush1.msra.mxu0 %v39
    %153 = vmatprep.subr.mxu0 0.0
    %154 = vmatpush1.msra.mxu0 %v40
    %155 = vmatprep.subr.mxu0 0.0
    %156 = vmatpush1.msra.mxu0 %v41
    %157 = vmatprep.subr.mxu0 0.0
    %158 = vmatpush1.msra.mxu0 0.0
    %159 = vmatprep.subr.mxu0 0.0
    %160 = vmatpush1.msra.mxu0 0.0
    %161 = vmatprep.subr.mxu0 0.0
    %162 = vmatpush1.msra.mxu0 0.0
    %163 = vmatprep.subr.mxu0 0.0
    %164 = vmatpush1.msra.mxu0 0.0
    %165 = vmatprep.subr.mxu0 0.0
    %166 = vmatpush1.msra.mxu0 0.0
    %167 = vmatprep.subr.mxu0 0.0
    %168 = vmatpush1.msra.mxu0 0.0
    %169 = vmatprep.subr.mxu0 0.0
    %170 = vmatpush1.msra.mxu0 0.0
    %171 = vmatprep.subr.mxu0 0.0
    %172 = vmatpush1.msra.mxu0 0.0
    %173 = vmatprep.subr.mxu0 0.0
    %174 = vmatpush1.msra.mxu0 0.0
    %175 = vmatprep.subr.mxu0 0.0
    %176 = vmatpush1.msra.mxu0 0.0
    %177 = vmatprep.subr.mxu0 0.0
    %178 = vmatpush1.msra.mxu0 0.0
    %179 = vmatprep.subr.mxu0 0.0
    %180 = vmatpush1.msra.mxu0 0.0
    %181 = vmatprep.subr.mxu0 0.0
    %182 = vmatpush1.msra.mxu0 0.0
    %183 = vmatprep.subr.mxu0 0.0
    %184 = vmatpush1.msra.mxu0 0.0
    %185 = vmatprep.subr.mxu0 0.0
    %186 = vmatpush1.msra.mxu0 0.0
    %187 = vmatprep.subr.mxu0 0.0
    %188 = vmatpush1.msra.mxu0 0.0
    %189 = vmatprep.subr.mxu0 0.0
    %190 = vmatpush1.msra.mxu0 0.0
    %191 = vmatprep.subr.mxu0 0.0
    %192 = vmatpush1.msra.mxu0 0.0
    %193 = vmatprep.subr.mxu0 0.0
    %194 = vmatpush1.msra.mxu0 0.0
    %195 = vmatprep.subr.mxu0 0.0
    %196 = vmatpush1.msra.mxu0 0.0
    %197 = vmatprep.subr.mxu0 0.0
    %198 = vmatpush1.msra.mxu0 0.0
    %199 = vmatprep.subr.mxu0 0.0
    %200 = vmatpush1.msra.mxu0 0.0
    %201 = vmatprep.subr.mxu0 0.0
    %202 = vmatpush1.msra.mxu0 0.0
    %203 = vmatprep.subr.mxu0 0.0
    %204 = vmatpush1.msra.mxu0 0.0
    %205 = vmatprep.mubr.f32.mxu0 0.0
    %206 = vmatmul.mubr.f32.gmra.mrb[0].mxu0 %v136
    %v207 = vpop.f32.mrb[0].mxu0
    %v208 = vadd.f32 %v127, %v207
    %v209 = vpop.f32.mrb[0].mxu0
    %210 = vmatprep.mubr.f32.mxu0 0.0
    %211 = vmatmul.mubr.f32.gmra.mrb[0].mxu0 %v139
    %v212 = vpop.f32.mrb[0].mxu0
    %v213 = vadd.f32 %v132, %v212
    %v214 = vpop.f32.mrb[0].mxu0
    %215 = vdwg.mxu0
    %v216 = vld [vmem:[%s0 + $0x2] sm:$0xff]
    %v217 = vld [vmem:[%s0 + $0xa] sm:$0xff]
    %s218 = scalar_lea.vmem [#allocation2], 128
    %v219 = vld [vmem:[%s218] sm:$0xff]
    %v220 = vld [vmem:[%s218 + $0x8] sm:$0xff]
    %v221 = vld [vmem:[%s218 + $0x10] sm:$0xff]
    %v222 = vld [vmem:[%s218 + $0x18] sm:$0xff]
    %v223 = vld [vmem:[%s218 + $0x20] sm:$0xff]
    %v224 = vld [vmem:[%s218 + $0x28] sm:$0xff]
    %v225 = vld [vmem:[%s218 + $0x30] sm:$0xff]
    %v226 = vld [vmem:[%s218 + $0x38] sm:$0xff]
    %v228 = vsel %vm53, %v216, 0
    %v231 = vsel %vm53, %v217, 0
    %233 = vmatprep.subr.mxu0 0.0
    %234 = vmatpush1.msra.mxu0 %v219
    %235 = vmatprep.subr.mxu0 0.0
    %236 = vmatpush1.msra.mxu0 %v220
    %237 = vmatprep.subr.mxu0 0.0
    %238 = vmatpush1.msra.mxu0 %v221
    %239 = vmatprep.subr.mxu0 0.0
    %240 = vmatpush1.msra.mxu0 %v222
    %241 = vmatprep.subr.mxu0 0.0
    %242 = vmatpush1.msra.mxu0 %v223
    %243 = vmatprep.subr.mxu0 0.0
    %244 = vmatpush1.msra.mxu0 %v224
    %245 = vmatprep.subr.mxu0 0.0
    %246 = vmatpush1.msra.mxu0 %v225
    %247 = vmatprep.subr.mxu0 0.0
    %248 = vmatpush1.msra.mxu0 %v226
    %249 = vmatprep.subr.mxu0 0.0
    %250 = vmatpush1.msra.mxu0 0.0
    %251 = vmatprep.subr.mxu0 0.0
    %252 = vmatpush1.msra.mxu0 0.0
    %253 = vmatprep.subr.mxu0 0.0
    %254 = vmatpush1.msra.mxu0 0.0
    %255 = vmatprep.subr.mxu0 0.0
    %256 = vmatpush1.msra.mxu0 0.0
    %257 = vmatprep.subr.mxu0 0.0
    %258 = vmatpush1.msra.mxu0 0.0
    %259 = vmatprep.subr.mxu0 0.0
    %260 = vmatpush1.msra.mxu0 0.0
    %261 = vmatprep.subr.mxu0 0.0
    %262 = vmatpush1.msra.mxu0 0.0
    %263 = vmatprep.subr.mxu0 0.0
    %264 = vmatpush1.msra.mxu0 0.0
    %265 = vmatprep.subr.mxu0 0.0
    %266 = vmatpush1.msra.mxu0 0.0
    %267 = vmatprep.subr.mxu0 0.0
    %268 = vmatpush1.msra.mxu0 0.0
    %269 = vmatprep.subr.mxu0 0.0
    %270 = vmatpush1.msra.mxu0 0.0
    %271 = vmatprep.subr.mxu0 0.0
    %272 = vmatpush1.msra.mxu0 0.0
    %273 = vmatprep.subr.mxu0 0.0
    %274 = vmatpush1.msra.mxu0 0.0
    %275 = vmatprep.subr.mxu0 0.0
    %276 = vmatpush1.msra.mxu0 0.0
    %277 = vmatprep.subr.mxu0 0.0
    %278 = vmatpush1.msra.mxu0 0.0
    %279 = vmatprep.subr.mxu0 0.0
    %280 = vmatpush1.msra.mxu0 0.0
    %281 = vmatprep.subr.mxu0 0.0
    %282 = vmatpush1.msra.mxu0 0.0
    %283 = vmatprep.subr.mxu0 0.0
    %284 = vmatpush1.msra.mxu0 0.0
    %285 = vmatprep.subr.mxu0 0.0
    %286 = vmatpush1.msra.mxu0 0.0
    %287 = vmatprep.subr.mxu0 0.0
    %288 = vmatpush1.msra.mxu0 0.0
    %289 = vmatprep.subr.mxu0 0.0
    %290 = vmatpush1.msra.mxu0 0.0
    %291 = vmatprep.subr.mxu0 0.0
    %292 = vmatpush1.msra.mxu0 0.0
    %293 = vmatprep.subr.mxu0 0.0
    %294 = vmatpush1.msra.mxu0 0.0
    %295 = vmatprep.subr.mxu0 0.0
    %296 = vmatpush1.msra.mxu0 0.0
    %297 = vmatprep.mubr.f32.mxu0 0.0
    %298 = vmatmul.mubr.f32.gmra.mrb[0].mxu0 %v228
    %v299 = vpop.f32.mrb[0].mxu0
    %v300 = vadd.f32 0.0, %v299
    %v301 = vpop.f32.mrb[0].mxu0
    %302 = vmatprep.mubr.f32.mxu0 0.0
    %303 = vmatmul.mubr.f32.gmra.mrb[0].mxu0 %v231
    %v304 = vpop.f32.mrb[0].mxu0
    %v305 = vadd.f32 0.0, %v304
    %v306 = vpop.f32.mrb[0].mxu0
    %307 = vdwg.mxu0
    %v308 = vadd.f32 %v208, %v300
    %v309 = vadd.f32 %v213, %v305
    %v310 = vld [vmem:[%s2] sm:$0x1]
    %v312 = vlaneseq
    %v313 = vshrl.u32 %v312, 7
    %v314 = vsub.s32 0, %v313
    %v315 = vrot.slane %v310, %v314
    %v317 = vmul.f32 %v308, %v315
    %v318 = vmul.f32 %v309, %v315
    %v319 = vld [vmem:[%s3] sm:$0x1]
    %v321 = vlaneseq
    %v322 = vshrl.u32 %v321, 7
    %v323 = vsub.s32 0, %v322
    %v324 = vrot.slane %v319, %v323
    %v326 = vadd.f32 %v317, %v324
    %v327 = vadd.f32 %v318, %v324
    %vm328 = vcmp.ge.f32.partialorder %v326, 1.0
    %vm329 = vcmp.ge.f32.partialorder %v327, 1.0
    %v330 = vsel %vm328, 1, 0
    %v331 = vsel %vm329, 1, 0
    %v332 = vcvt.s32.f32 %v330
    %v333 = vcvt.s32.f32 %v331
    %v334 = vpack.c.bf16 %v333, %v332
    %v336 = vunpack.c.l.b16 %v334
    %v337 = vunpack.c.h.b16 %v334
    %v338 = vpack.c.b16 %v336, %v336
    %v339 = vpack.c.b16 %v337, %v337
    %342 = vst [vmem:[#allocation5] sm:$0xf] %v338
    %343 = vst [vmem:[#allocation5 + $0x4] sm:$0xf] %v339
    %s344 = scalar_lea.vmem %s0, 24
    %v345 = vld [vmem:[%s344] sm:$0xff]
    %v346 = vld [vmem:[%s344 + $0x8] sm:$0xff]
    %v347 = vld [vmem:[#allocation2] sm:$0xff]
    %v348 = vld [vmem:[#allocation2 + $0x8] sm:$0xff]
    %v349 = vld [vmem:[#allocation2 + $0x10] sm:$0xff]
    %v350 = vld [vmem:[#allocation2 + $0x18] sm:$0xff]
    %v351 = vld [vmem:[#allocation2 + $0x20] sm:$0xff]
    %v352 = vld [vmem:[#allocation2 + $0x28] sm:$0xff]
    %v353 = vld [vmem:[#allocation2 + $0x30] sm:$0xff]
    %v354 = vld [vmem:[#allocation2 + $0x38] sm:$0xff]
    %v355 = vld [vmem:[%s344 + $0x1] sm:$0xff]
    %v356 = vld [vmem:[%s344 + $0x9] sm:$0xff]
    %v357 = vld [vmem:[%s44] sm:$0xff]
    %v358 = vld [vmem:[%s44 + $0x8] sm:$0xff]
    %v359 = vld [vmem:[%s44 + $0x10] sm:$0xff]
    %v360 = vld [vmem:[%s44 + $0x18] sm:$0xff]
    %v361 = vld [vmem:[%s44 + $0x20] sm:$0xff]
    %v362 = vld [vmem:[%s44 + $0x28] sm:$0xff]
    %v363 = vld [vmem:[%s44 + $0x30] sm:$0xff]
    %v364 = vld [vmem:[%s44 + $0x38] sm:$0xff]
    %v366 = vsel %vm53, %v355, 0
    %v369 = vsel %vm53, %v356, 0
    %371 = vmatprep.subr.mxu0 0.0
    %372 = vmatpush1.msra.mxu0 %v357
    %373 = vmatprep.subr.mxu0 0.0
    %374 = vmatpush1.msra.mxu0 %v358
    %375 = vmatprep.subr.mxu0 0.0
    %376 = vmatpush1.msra.mxu0 %v359
    %377 = vmatprep.subr.mxu0 0.0
    %378 = vmatpush1.msra.mxu0 %v360
    %379 = vmatprep.subr.mxu0 0.0
    %380 = vmatpush1.msra.mxu0 %v361
    %381 = vmatprep.subr.mxu0 0.0
    %382 = vmatpush1.msra.mxu0 %v362
    %383 = vmatprep.subr.mxu0 0.0
    %384 = vmatpush1.msra.mxu0 %v363
    %385 = vmatprep.subr.mxu0 0.0
    %386 = vmatpush1.msra.mxu0 %v364
    %387 = vmatprep.subr.mxu0 0.0
    %388 = vmatpush1.msra.mxu0 0.0
    %389 = vmatprep.subr.mxu0 0.0
    %390 = vmatpush1.msra.mxu0 0.0
    %391 = vmatprep.subr.mxu0 0.0
    %392 = vmatpush1.msra.mxu0 0.0
    %393 = vmatprep.subr.mxu0 0.0
    %394 = vmatpush1.msra.mxu0 0.0
    %395 = vmatprep.subr.mxu0 0.0
    %396 = vmatpush1.msra.mxu0 0.0
    %397 = vmatprep.subr.mxu0 0.0
    %398 = vmatpush1.msra.mxu0 0.0
    %399 = vmatprep.subr.mxu0 0.0
    %400 = vmatpush1.msra.mxu0 0.0
    %401 = vmatprep.subr.mxu0 0.0
    %402 = vmatpush1.msra.mxu0 0.0
    %403 = vmatprep.subr.mxu0 0.0
    %404 = vmatpush1.msra.mxu0 0.0
    %405 = vmatprep.subr.mxu0 0.0
    %406 = vmatpush1.msra.mxu0 0.0
    %407 = vmatprep.subr.mxu0 0.0
    %408 = vmatpush1.msra.mxu0 0.0
    %409 = vmatprep.subr.mxu0 0.0
    %410 = vmatpush1.msra.mxu0 0.0
    %411 = vmatprep.subr.mxu0 0.0
    %412 = vmatpush1.msra.mxu0 0.0
    %413 = vmatprep.subr.mxu0 0.0
    %414 = vmatpush1.msra.mxu0 0.0
    %415 = vmatprep.subr.mxu0 0.0
    %416 = vmatpush1.msra.mxu0 0.0
    %417 = vmatprep.subr.mxu0 0.0
    %418 = vmatpush1.msra.mxu0 0.0
    %419 = vmatprep.subr.mxu0 0.0
    %420 = vmatpush1.msra.mxu0 0.0
    %421 = vmatprep.subr.mxu0 0.0
    %422 = vmatpush1.msra.mxu0 0.0
    %423 = vmatprep.subr.mxu0 0.0
    %424 = vmatpush1.msra.mxu0 0.0
    %425 = vmatprep.subr.mxu0 0.0
    %426 = vmatpush1.msra.mxu0 0.0
    %427 = vmatprep.subr.mxu0 0.0
    %428 = vmatpush1.msra.mxu0 0.0
    %429 = vmatprep.subr.mxu0 0.0
    %430 = vmatpush1.msra.mxu0 0.0
    %431 = vmatprep.subr.mxu0 0.0
    %432 = vmatpush1.msra.mxu0 0.0
    %433 = vmatprep.subr.mxu0 0.0
    %434 = vmatpush1.msra.mxu0 0.0
    %435 = vmatprep.mubr.f32.mxu0 0.0
    %436 = vmatmul.mubr.f32.gmra.mrb[0].mxu0 %v366
    %v437 = vpop.f32.mrb[0].mxu0
    %v438 = vadd.f32 0.0, %v437
    %v439 = vpop.f32.mrb[0].mxu0
    %440 = vmatprep.mubr.f32.mxu0 0.0
    %441 = vmatmul.mubr.f32.gmra.mrb[0].mxu0 %v369
    %v442 = vpop.f32.mrb[0].mxu0
    %v443 = vadd.f32 0.0, %v442
    %v444 = vpop.f32.mrb[0].mxu0
    %445 = vdwg.mxu0
    %v447 = vsel %vm53, %v345, 0
    %v450 = vsel %vm53, %v346, 0
    %452 = vmatprep.subr.mxu0 0.0
    %453 = vmatpush1.msra.mxu0 %v347
    %454 = vmatprep.subr.mxu0 0.0
    %455 = vmatpush1.msra.mxu0 %v348
    %456 = vmatprep.subr.mxu0 0.0
    %457 = vmatpush1.msra.mxu0 %v349
    %458 = vmatprep.subr.mxu0 0.0
    %459 = vmatpush1.msra.mxu0 %v350
    %460 = vmatprep.subr.mxu0 0.0
    %461 = vmatpush1.msra.mxu0 %v351
    %462 = vmatprep.subr.mxu0 0.0
    %463 = vmatpush1.msra.mxu0 %v352
    %464 = vmatprep.subr.mxu0 0.0
    %465 = vmatpush1.msra.mxu0 %v353
    %466 = vmatprep.subr.mxu0 0.0
    %467 = vmatpush1.msra.mxu0 %v354
    %468 = vmatprep.subr.mxu0 0.0
    %469 = vmatpush1.msra.mxu0 0.0
    %470 = vmatprep.subr.mxu0 0.0
    %471 = vmatpush1.msra.mxu0 0.0
    %472 = vmatprep.subr.mxu0 0.0
    %473 = vmatpush1.msra.mxu0 0.0
    %474 = vmatprep.subr.mxu0 0.0
    %475 = vmatpush1.msra.mxu0 0.0
    %476 = vmatprep.subr.mxu0 0.0
    %477 = vmatpush1.msra.mxu0 0.0
    %478 = vmatprep.subr.mxu0 0.0
    %479 = vmatpush1.msra.mxu0 0.0
    %480 = vmatprep.subr.mxu0 0.0
    %481 = vmatpush1.msra.mxu0 0.0
    %482 = vmatprep.subr.mxu0 0.0
    %483 = vmatpush1.msra.mxu0 0.0
    %484 = vmatprep.subr.mxu0 0.0
    %485 = vmatpush1.msra.mxu0 0.0
    %486 = vmatprep.subr.mxu0 0.0
    %487 = vmatpush1.msra.mxu0 0.0
    %488 = vmatprep.subr.mxu0 0.0
    %489 = vmatpush1.msra.mxu0 0.0
    %490 = vmatprep.subr.mxu0 0.0
    %491 = vmatpush1.msra.mxu0 0.0
    %492 = vmatprep.subr.mxu0 0.0
    %493 = vmatpush1.msra.mxu0 0.0
    %494 = vmatprep.subr.mxu0 0.0
    %495 = vmatpush1.msra.mxu0 0.0
    %496 = vmatprep.subr.mxu0 0.0
    %497 = vmatpush1.msra.mxu0 0.0
    %498 = vmatprep.subr.mxu0 0.0
    %499 = vmatpush1.msra.mxu0 0.0
    %500 = vmatprep.subr.mxu0 0.0
    %501 = vmatpush1.msra.mxu0 0.0
    %502 = vmatprep.subr.mxu0 0.0
    %503 = vmatpush1.msra.mxu0 0.0
    %504 = vmatprep.subr.mxu0 0.0
    %505 = vmatpush1.msra.mxu0 0.0
    %506 = vmatprep.subr.mxu0 0.0
    %507 = vmatpush1.msra.mxu0 0.0
    %508 = vmatprep.subr.mxu0 0.0
    %509 = vmatpush1.msra.mxu0 0.0
    %510 = vmatprep.subr.mxu0 0.0
    %511 = vmatpush1.msra.mxu0 0.0
    %512 = vmatprep.subr.mxu0 0.0
    %513 = vmatpush1.msra.mxu0 0.0
    %514 = vmatprep.subr.mxu0 0.0
    %515 = vmatpush1.msra.mxu0 0.0
    %516 = vmatprep.mubr.f32.mxu0 0.0
    %517 = vmatmul.mubr.f32.gmra.mrb[0].mxu0 %v447
    %v518 = vpop.f32.mrb[0].mxu0
    %v519 = vadd.f32 %v438, %v518
    %v520 = vpop.f32.mrb[0].mxu0
    %521 = vmatprep.mubr.f32.mxu0 0.0
    %522 = vmatmul.mubr.f32.gmra.mrb[0].mxu0 %v450
    %v523 = vpop.f32.mrb[0].mxu0
    %v524 = vadd.f32 %v443, %v523
    %v525 = vpop.f32.mrb[0].mxu0
    %526 = vdwg.mxu0
    %v527 = vld [vmem:[%s344 + $0x2] sm:$0xff]
    %v528 = vld [vmem:[%s344 + $0xa] sm:$0xff]
    %v529 = vld [vmem:[%s218] sm:$0xff]
    %v530 = vld [vmem:[%s218 + $0x8] sm:$0xff]
    %v531 = vld [vmem:[%s218 + $0x10] sm:$0xff]
    %v532 = vld [vmem:[%s218 + $0x18] sm:$0xff]
    %v533 = vld [vmem:[%s218 + $0x20] sm:$0xff]
    %v534 = vld [vmem:[%s218 + $0x28] sm:$0xff]
    %v535 = vld [vmem:[%s218 + $0x30] sm:$0xff]
    %v536 = vld [vmem:[%s218 + $0x38] sm:$0xff]
    %v538 = vsel %vm53, %v527, 0
    %v541 = vsel %vm53, %v528, 0
    %543 = vmatprep.subr.mxu0 0.0
    %544 = vmatpush1.msra.mxu0 %v529
    %545 = vmatprep.subr.mxu0 0.0
    %546 = vmatpush1.msra.mxu0 %v530
    %547 = vmatprep.subr.mxu0 0.0
    %548 = vmatpush1.msra.mxu0 %v531
    %549 = vmatprep.subr.mxu0 0.0
    %550 = vmatpush1.msra.mxu0 %v532
    %551 = vmatprep.subr.mxu0 0.0
    %552 = vmatpush1.msra.mxu0 %v533
    %553 = vmatprep.subr.mxu0 0.0
    %554 = vmatpush1.msra.mxu0 %v534
    %555 = vmatprep.subr.mxu0 0.0
    %556 = vmatpush1.msra.mxu0 %v535
    %557 = vmatprep.subr.mxu0 0.0
    %558 = vmatpush1.msra.mxu0 %v536
    %559 = vmatprep.subr.mxu0 0.0
    %560 = vmatpush1.msra.mxu0 0.0
    %561 = vmatprep.subr.mxu0 0.0
    %562 = vmatpush1.msra.mxu0 0.0
    %563 = vmatprep.subr.mxu0 0.0
    %564 = vmatpush1.msra.mxu0 0.0
    %565 = vmatprep.subr.mxu0 0.0
    %566 = vmatpush1.msra.mxu0 0.0
    %567 = vmatprep.subr.mxu0 0.0
    %568 = vmatpush1.msra.mxu0 0.0
    %569 = vmatprep.subr.mxu0 0.0
    %570 = vmatpush1.msra.mxu0 0.0
    %571 = vmatprep.subr.mxu0 0.0
    %572 = vmatpush1.msra.mxu0 0.0
    %573 = vmatprep.subr.mxu0 0.0
    %574 = vmatpush1.msra.mxu0 0.0
    %575 = vmatprep.subr.mxu0 0.0
    %576 = vmatpush1.msra.mxu0 0.0
    %577 = vmatprep.subr.mxu0 0.0
    %578 = vmatpush1.msra.mxu0 0.0
    %579 = vmatprep.subr.mxu0 0.0
    %580 = vmatpush1.msra.mxu0 0.0
    %581 = vmatprep.subr.mxu0 0.0
    %582 = vmatpush1.msra.mxu0 0.0
    %583 = vmatprep.subr.mxu0 0.0
    %584 = vmatpush1.msra.mxu0 0.0
    %585 = vmatprep.subr.mxu0 0.0
    %586 = vmatpush1.msra.mxu0 0.0
    %587 = vmatprep.subr.mxu0 0.0
    %588 = vmatpush1.msra.mxu0 0.0
    %589 = vmatprep.subr.mxu0 0.0
    %590 = vmatpush1.msra.mxu0 0.0
    %591 = vmatprep.subr.mxu0 0.0
    %592 = vmatpush1.msra.mxu0 0.0
    %593 = vmatprep.subr.mxu0 0.0
    %594 = vmatpush1.msra.mxu0 0.0
    %595 = vmatprep.subr.mxu0 0.0
    %596 = vmatpush1.msra.mxu0 0.0
    %597 = vmatprep.subr.mxu0 0.0
    %598 = vmatpush1.msra.mxu0 0.0
    %599 = vmatprep.subr.mxu0 0.0
    %600 = vmatpush1.msra.mxu0 0.0
    %601 = vmatprep.subr.mxu0 0.0
    %602 = vmatpush1.msra.mxu0 0.0
    %603 = vmatprep.subr.mxu0 0.0
    %604 = vmatpush1.msra.mxu0 0.0
    %605 = vmatprep.subr.mxu0 0.0
    %606 = vmatpush1.msra.mxu0 0.0
    %607 = vmatprep.mubr.f32.mxu0 0.0
    %608 = vmatmul.mubr.f32.gmra.mrb[0].mxu0 %v538
    %v609 = vpop.f32.mrb[0].mxu0
    %v610 = vadd.f32 0.0, %v609
    %v611 = vpop.f32.mrb[0].mxu0
    %612 = vmatprep.mubr.f32.mxu0 0.0
    %613 = vmatmul.mubr.f32.gmra.mrb[0].mxu0 %v541
    %v614 = vpop.f32.mrb[0].mxu0
    %v615 = vadd.f32 0.0, %v614
    %v616 = vpop.f32.mrb[0].mxu0
    %617 = vdwg.mxu0
    %v618 = vadd.f32 %v519, %v610
    %v619 = vadd.f32 %v524, %v615
    %v620 = vld [vmem:[%s2] sm:$0x1]
    %v622 = vlaneseq
    %v623 = vshrl.u32 %v622, 7
    %v624 = vsub.s32 0, %v623
    %v625 = vrot.slane %v620, %v624
    %v627 = vmul.f32 %v618, %v625
    %v628 = vmul.f32 %v619, %v625
    %v629 = vld [vmem:[%s3] sm:$0x1]
    %v631 = vlaneseq
    %v632 = vshrl.u32 %v631, 7
    %v633 = vsub.s32 0, %v632
    %v634 = vrot.slane %v629, %v633
    %v636 = vadd.f32 %v627, %v634
    %v637 = vadd.f32 %v628, %v634
    %vm638 = vcmp.ge.f32.partialorder %v636, 1.0
    %vm639 = vcmp.ge.f32.partialorder %v637, 1.0
    %v640 = vsel %vm638, 1, 0
    %v641 = vsel %vm639, 1, 0
    %v642 = vcvt.s32.f32 %v640
    %v643 = vcvt.s32.f32 %v641
    %v644 = vpack.c.bf16 %v643, %v642
    %v646 = vunpack.c.l.b16 %v644
    %v647 = vunpack.c.h.b16 %v644
    %v648 = vpack.c.b16 %v646, %v646
    %v649 = vpack.c.b16 %v647, %v647
    %s652 = scalar_lea.vmem [#allocation5], 8
    %653 = vst [vmem:[%s652] sm:$0xf] %v648
    %654 = vst [vmem:[%s652 + $0x4] sm:$0xf] %v649
    // Predicated region
    $region22: #{tpu_custom_call.1} parent=1 // pred_check
      _
    $region23: #{tpu_custom_call.1} parent=1 // pred_check_branch
      %656 = sbr.rel (0) target = $region25
    $region24: #{tpu_custom_call.1} parent=1 // pred_region
      %s658 = ssub.s32 256, 256
      %659 = vsyncadd [#allocation4], %s658
      %s660 = sshll.u32 [#allocation5], 4
      %s661 = int_to_ptr.vmem [resolvable:$true] %s660
      %666 = dma.vmem_to_hbm [thread:$0]  %s661, 256, %s4, [#allocation4], 64, 64, 4
    $region25: #{tpu_custom_call.1} parent=1 // pred_fallthru
      _
    // Predicated region
    $region26: #{tpu_custom_call.1} parent=1 // pred_check
      _
    $region27: #{tpu_custom_call.1} parent=1 // pred_check_branch
      %668 = sbr.rel (0) target = $region29
    $region28: #{tpu_custom_call.1} parent=1 // pred_region
      %669 = dma.done [#allocation4], 256
    $region29: #{tpu_custom_call.1} parent=1 // pred_fallthru
      _
    %670 = vsyncpa [#allocation3], 1
    %671 = vsyncpa [#allocation4], 1

</llo_original>
